<compile_context>
chip_gen: v7x
topology: tpu7x:2x2x1
jax: 0.10.0
libtpu: 0.0.40
codegen_flags: <defaults>
</compile_context>

<pallas_src>
import jax
import jax.numpy as jnp
from jax.experimental import pallas as pl
from jax.experimental.pallas import tpu as pltpu


def _lm_kernel(x_ref, wq_ref, bq_ref, wk_ref, bk_ref, wv_ref, bv_ref,
               wo_ref, bo_ref, gamma_ref, beta_ref, wout_ref, bout_ref,
               out_ref, normed_ref):
    """grid = (batch_tiles, vocab_tiles); vocab axis innermost ('arbitrary').

    At the first vocab tile of each batch tile, attention + LayerNorm for that batch tile is
    computed into the VMEM scratch `normed_ref` (persists across vocab tiles).  Every vocab
    step then only performs the [rows, D] x [D, TV] output projection for its vocab tile.
    """
    jv = pl.program_id(1)

    @pl.when(jv == 0)
    def _attention_and_layernorm():
        x = x_ref[...]                                   # [bt, T, E] bf16
        bt, T, E = x.shape
        D = wq_ref.shape[1]
        rows = bt * T
        xf = x.reshape(rows, E)                          # flattened rows for the projections

        # ---- Q/K/V projections (bf16 operands, f32 accumulation on the MXU) ----
        q = jnp.dot(xf, wq_ref[...], preferred_element_type=jnp.float32) + bq_ref[...]
        k = jnp.dot(xf, wk_ref[...], preferred_element_type=jnp.float32) + bk_ref[...]
        v = jnp.dot(xf, wv_ref[...], preferred_element_type=jnp.float32) + bv_ref[...]

        # Fold 1/sqrt(D) into q: scales [rows, D] instead of [bt, T, T].
        q = q * (1.0 / float(D) ** 0.5)

        qb = q.reshape(bt, T, D).astype(jnp.bfloat16)
        kb = k.reshape(bt, T, D).astype(jnp.bfloat16)
        vb = v.reshape(bt, T, D).astype(jnp.bfloat16)

        # ---- scaled-dot-product attention (batched einsum; no explicit k transpose) ----
        # TODO(synk): unmasked single-head SDPA; add causal mask / heads if the reference
        #             Attention has them.
        scores = jnp.einsum('bqd,bkd->bqk', qb, kb,
                            preferred_element_type=jnp.float32)          # [bt, T, T] f32
        m = jnp.max(scores, axis=-1, keepdims=True)
        p = jnp.exp(scores - m)
        inv_l = pl.reciprocal(jnp.sum(p, axis=-1, keepdims=True), approx=True)
        probs = (p * inv_l).astype(jnp.bfloat16)

        attn = jnp.einsum('bqk,bkd->bqd', probs, vb,
                          preferred_element_type=jnp.float32)            # [bt, T, D] f32
        attn_f = attn.reshape(rows, D).astype(jnp.bfloat16)

        ctx = jnp.dot(attn_f, wo_ref[...],
                      preferred_element_type=jnp.float32) + bo_ref[...]  # [rows, D] f32

        # ---- LayerNorm over D in f32 (eps matches nn.LayerNorm default) ----
        mean = jnp.mean(ctx, axis=-1, keepdims=True)
        var = jnp.mean(jnp.square(ctx - mean), axis=-1, keepdims=True)
        normed = (ctx - mean) * jax.lax.rsqrt(var + 1e-5)
        normed = normed * gamma_ref[...] + beta_ref[...]

        normed_ref[...] = normed.astype(jnp.bfloat16)

    # ---- per-vocab-tile output projection: [rows, D] x [D, TV] -> [rows, TV] ----
    logits = jnp.dot(normed_ref[...], wout_ref[...],
                     preferred_element_type=jnp.float32) + bout_ref[...]
    out_ref[...] = logits.astype(out_ref.dtype)


def prepare_params(params, *, vocab_tile=512):
    """One-time weight preparation (do OUTSIDE the per-call forward / jit):
    bf16 cast of matmul weights + embedding table, and vocab padding of wout/bout to a
    multiple of the (lane-dense) vocab tile.  Avoids re-reading/re-writing the full [D, V]
    output weight on every forward call."""
    V = params["wout"].shape[1]
    tv = int(vocab_tile)
    n_vtiles = pl.cdiv(V, tv)
    v_pad = n_vtiles * tv
    bf16 = jnp.bfloat16
    prepared = {
        "embedding": params["embedding"].astype(bf16),     # gather produces bf16 directly
        "wq": params["wq"].astype(bf16), "bq": params["bq"],
        "wk": params["wk"].astype(bf16), "bk": params["bk"],
        "wv": params["wv"].astype(bf16), "bv": params["bv"],
        "wo": params["wo"].astype(bf16), "bo": params["bo"],
        "ln_gamma": params["ln_gamma"], "ln_beta": params["ln_beta"],
        "wout": jnp.pad(params["wout"], ((0, 0), (0, v_pad - V))).astype(bf16),
        "bout": jnp.pad(params["bout"], ((0, 0), (0, v_pad - V))),
    }
    meta = {"vocab_size": V, "vocab_tile": tv, "padded_vocab": v_pad}
    return prepared, meta


def language_model_forward(tokens, prepared, meta, *, batch_tile=None,
                           logits_dtype=jnp.float32,
                           vmem_limit_bytes=48 * 1024 * 1024):
    """tokens: [B, T] int32 -> logits [B, T, V] (logits_dtype, default f32).

    batch_tile: rows-sharding of the leading 'parallel' grid axis.  Default None -> whole
    batch in one tile (best on single-TC v5e/v6e).  On v7x set batch_tile=B//2 so both
    TensorCores run.
    vmem_limit_bytes: 48 MiB is safe on all generations; raise to 64-100 MiB on v5e/v6e
    (128 MiB physical) to allow larger vocab tiles / deeper buffering; keep <=48 MiB on v7x.
    """
    V = meta["vocab_size"]
    tv = meta["vocab_tile"]
    v_pad = meta["padded_vocab"]

    # TODO(synk): fuse the embedding gather into the kernel via scalar-prefetched token ids +
    #             pl.Element row gather to remove the [B,T,E] HBM round trip entirely.
    x = prepared["embedding"][tokens]                    # [B, T, E] bf16
    if x.ndim == 2:                                      # mirror the PyTorch unsqueeze(0)
        x = x[None]

    B, T, E = x.shape
    D = prepared["wq"].shape[1]
    rows = B * T

    bt = B if batch_tile is None else int(batch_tile)
    assert B % bt == 0, "batch_tile must divide the batch size"
    assert (bt * T) % 8 == 0 or bt * T == rows, "rows per batch tile must be a multiple of 8"
    n_btiles = B // bt
    n_vtiles = v_pad // tv

    fixed = lambda *shape: pl.BlockSpec(shape, lambda bi, jv: tuple(0 for _ in shape))

    logits_flat = pl.pallas_call(
        _lm_kernel,
        out_shape=jax.ShapeDtypeStruct((rows, v_pad), logits_dtype),
        grid_spec=pltpu.PrefetchScalarGridSpec(
            num_scalar_prefetch=0,
            grid=(n_btiles, n_vtiles),
            in_specs=[
                pl.BlockSpec((bt, T, E), lambda bi, jv: (bi, 0, 0)),   # x rows for this tile
                fixed(E, D),                                            # wq
                fixed(1, D),                                            # bq
                fixed(E, D),                                            # wk
                fixed(1, D),                                            # bk
                fixed(E, D),                                            # wv
                fixed(1, D),                                            # bv
                fixed(D, D),                                            # wo
                fixed(1, D),                                            # bo
                fixed(1, D),                                            # layernorm gamma
                fixed(1, D),                                            # layernorm beta
                pl.BlockSpec((D, tv), lambda bi, jv: (0, jv)),          # wout vocab tile
                pl.BlockSpec((1, tv), lambda bi, jv: (0, jv)),          # bout vocab tile
            ],
            out_specs=pl.BlockSpec((bt * T, tv), lambda bi, jv: (bi, jv)),
            scratch_shapes=[pltpu.VMEM((bt * T, D), jnp.bfloat16)],     # normed (per batch tile)
        ),
        compiler_params=pltpu.CompilerParams(
            dimension_semantics=("parallel", "arbitrary"),
            vmem_limit_bytes=vmem_limit_bytes,
        ),
    )(x, prepared["wq"], prepared["bq"], prepared["wk"], prepared["bk"],
      prepared["wv"], prepared["bv"], prepared["wo"], prepared["bo"],
      prepared["ln_gamma"], prepared["ln_beta"], prepared["wout"], prepared["bout"])

    return logits_flat.reshape(B, T, v_pad)[:, :, :V]


def init_params(key, vocab_size, embedding_dim, output_dim):
    keys = jax.random.split(key, 8)
    scale_e = 1.0 / jnp.sqrt(jnp.float32(embedding_dim))
    scale_d = 1.0 / jnp.sqrt(jnp.float32(output_dim))
    return {
        "embedding": jax.random.normal(keys[0], (vocab_size, embedding_dim), jnp.float32),
        "wq": jax.random.normal(keys[1], (embedding_dim, output_dim), jnp.float32) * scale_e,
        "bq": jnp.zeros((1, output_dim), jnp.float32),
        "wk": jax.random.normal(keys[2], (embedding_dim, output_dim), jnp.float32) * scale_e,
        "bk": jnp.zeros((1, output_dim), jnp.float32),
        "wv": jax.random.normal(keys[3], (embedding_dim, output_dim), jnp.float32) * scale_e,
        "bv": jnp.zeros((1, output_dim), jnp.float32),
        "wo": jax.random.normal(keys[4], (output_dim, output_dim), jnp.float32) * scale_d,
        "bo": jnp.zeros((1, output_dim), jnp.float32),
        "ln_gamma": jnp.ones((1, output_dim), jnp.float32),
        "ln_beta": jnp.zeros((1, output_dim), jnp.float32),
        "wout": jax.random.normal(keys[5], (output_dim, vocab_size), jnp.float32) * scale_d,
        "bout": jnp.zeros((1, vocab_size), jnp.float32),
    }


def _reference_forward(tokens, params):
    """Pure-JAX f32 reference (exact softmax / f32 weights) for tolerance validation."""
    x = params["embedding"][tokens].astype(jnp.float32)
    if x.ndim == 2:
        x = x[None]
    q = x @ params["wq"] + params["bq"]
    k = x @ params["wk"] + params["bk"]
    v = x @ params["wv"] + params["bv"]
    D = q.shape[-1]
    scores = jnp.einsum('bqd,bkd->bqk', q, k) / jnp.sqrt(jnp.float32(D))
    probs = jax.nn.softmax(scores, axis=-1)
    attn = jnp.einsum('bqk,bkd->bqd', probs, v)
    ctx = attn @ params["wo"] + params["bo"]
    mean = ctx.mean(-1, keepdims=True)
    var = jnp.square(ctx - mean).mean(-1, keepdims=True)
    normed = (ctx - mean) * jax.lax.rsqrt(var + 1e-5)
    normed = normed * params["ln_gamma"] + params["ln_beta"]
    return normed @ params["wout"] + params["bout"]


if __name__ == "__main__":
    # Small config consistent with the module's forward.
    vocab_size, embedding_dim, output_dim = 64, 32, 32
    batch, seq = 2, 8

    key = jax.random.PRNGKey(0)
    pkey, tkey = jax.random.split(key)
    params = init_params(pkey, vocab_size, embedding_dim, output_dim)
    tokens = jax.random.randint(tkey, (batch, seq), 0, vocab_size, dtype=jnp.int32)

    prepared, meta = prepare_params(params, vocab_tile=512)

    ref = _reference_forward(tokens, params)

    # Default path: single batch tile (v5e/v6e).
    logits = language_model_forward(tokens, prepared, meta)
    jax.block_until_ready(logits)
    assert logits.shape == (batch, seq, vocab_size), logits.shape
    assert bool(jnp.isfinite(logits).all()), "non-finite logits"
    err = float(jnp.max(jnp.abs(logits - ref)))
    assert err < 0.25, f"mismatch vs f32 reference (max abs err {err})"

    # Row-sharded path: leading 'parallel' batch axis (uses both TensorCores on v7x).
    logits2 = language_model_forward(tokens, prepared, meta, batch_tile=1)
    jax.block_until_ready(logits2)
    assert logits2.shape == (batch, seq, vocab_size), logits2.shape
    err2 = float(jnp.max(jnp.abs(logits2 - ref)))
    assert err2 < 0.25, f"batch-tiled mismatch vs f32 reference (max abs err {err2})"

    print("KERNEL_OK")
</pallas_src>

<mosaic_0001>
module attributes {stable_mosaic.version = 11 : i64} {
  func.func @_lm_kernel(%arg0: i32, %arg1: i32, %arg2: memref<2x8x32xbf16, #tpu.memory_space<vmem>>, %arg3: memref<32x32xbf16, #tpu.memory_space<vmem>>, %arg4: memref<1x32xf32, #tpu.memory_space<vmem>>, %arg5: memref<32x32xbf16, #tpu.memory_space<vmem>>, %arg6: memref<1x32xf32, #tpu.memory_space<vmem>>, %arg7: memref<32x32xbf16, #tpu.memory_space<vmem>>, %arg8: memref<1x32xf32, #tpu.memory_space<vmem>>, %arg9: memref<32x32xbf16, #tpu.memory_space<vmem>>, %arg10: memref<1x32xf32, #tpu.memory_space<vmem>>, %arg11: memref<1x32xf32, #tpu.memory_space<vmem>>, %arg12: memref<1x32xf32, #tpu.memory_space<vmem>>, %arg13: memref<32x512xbf16, #tpu.memory_space<vmem>>, %arg14: memref<1x512xf32, #tpu.memory_space<vmem>>, %arg15: memref<16x512xf32, #tpu.memory_space<vmem>>, %arg16: memref<16x32xbf16, #tpu.memory_space<vmem>>) attributes {dimension_semantics = [#tpu.dimension_semantics<parallel>, #tpu.dimension_semantics<arbitrary>], iteration_bounds = array<i64: 1, 1>, scalar_prefetch = 0 : i64, scratch_operands = 1 : i64, tpu.core_type = #tpu.core_type<tc>, window_params = [{transform_indices = @transform_0, window_bounds = array<i64: 2, 8, 32>}, {pipeline_mode = #tpu.pipeline_mode<synchronous>, transform_indices = @transform_1, window_bounds = array<i64: 32, 32>}, {pipeline_mode = #tpu.pipeline_mode<synchronous>, transform_indices = @transform_2, window_bounds = array<i64: 1, 32>}, {pipeline_mode = #tpu.pipeline_mode<synchronous>, transform_indices = @transform_3, window_bounds = array<i64: 32, 32>}, {pipeline_mode = #tpu.pipeline_mode<synchronous>, transform_indices = @transform_4, window_bounds = array<i64: 1, 32>}, {pipeline_mode = #tpu.pipeline_mode<synchronous>, transform_indices = @transform_5, window_bounds = array<i64: 32, 32>}, {pipeline_mode = #tpu.pipeline_mode<synchronous>, transform_indices = @transform_6, window_bounds = array<i64: 1, 32>}, {pipeline_mode = #tpu.pipeline_mode<synchronous>, transform_indices = @transform_7, window_bounds = array<i64: 32, 32>}, {pipeline_mode = #tpu.pipeline_mode<synchronous>, transform_indices = @transform_8, window_bounds = array<i64: 1, 32>}, {pipeline_mode = #tpu.pipeline_mode<synchronous>, transform_indices = @transform_9, window_bounds = array<i64: 1, 32>}, {pipeline_mode = #tpu.pipeline_mode<synchronous>, transform_indices = @transform_10, window_bounds = array<i64: 1, 32>}, {transform_indices = @transform_11, window_bounds = array<i64: 32, 512>}, {transform_indices = @transform_12, window_bounds = array<i64: 1, 512>}, {transform_indices = @transform_13, window_bounds = array<i64: 16, 512>}]} {
    %c0_i32 = arith.constant 0 : i32
    %0 = arith.cmpi eq, %arg1, %c0_i32 : i32
    %1 = arith.extui %0 : i1 to i32
    %c0_i32_0 = arith.constant 0 : i32
    %2 = arith.cmpi ne, %1, %c0_i32_0 : i32
    scf.if %2 {
      %c0_8 = arith.constant 0 : index
      %c0_9 = arith.constant 0 : index
      %c0_10 = arith.constant 0 : index
      %10 = vector.load %arg2[%c0_8, %c0_9, %c0_10] : memref<2x8x32xbf16, #tpu.memory_space<vmem>>, vector<2x8x32xbf16>
      %11 = vector.shape_cast %10 : vector<2x8x32xbf16> to vector<16x32xbf16>
      %c0_11 = arith.constant 0 : index
      %c0_12 = arith.constant 0 : index
      %12 = vector.load %arg3[%c0_11, %c0_12] : memref<32x32xbf16, #tpu.memory_space<vmem>>, vector<32x32xbf16>
      %cst_13 = arith.constant dense<0.000000e+00> : vector<16x32xf32>
      %13 = tpu.matmul %11, %12, %cst_13 {dimension_numbers = #tpu.dot_dimension_numbers<[1], [0], [0], [1], [0, 0, 1, 1], [], []>} : vector<16x32xbf16>, vector<32x32xbf16>, vector<16x32xf32> -> vector<16x32xf32>
      %c0_14 = arith.constant 0 : index
      %c0_15 = arith.constant 0 : index
      %14 = vector.load %arg4[%c0_14, %c0_15] : memref<1x32xf32, #tpu.memory_space<vmem>>, vector<1x32xf32>
      %15 = vector.broadcast %14 : vector<1x32xf32> to vector<16x32xf32>
      %16 = arith.addf %13, %15 : vector<16x32xf32>
      %c0_16 = arith.constant 0 : index
      %c0_17 = arith.constant 0 : index
      %17 = vector.load %arg5[%c0_16, %c0_17] : memref<32x32xbf16, #tpu.memory_space<vmem>>, vector<32x32xbf16>
      %cst_18 = arith.constant dense<0.000000e+00> : vector<16x32xf32>
      %18 = tpu.matmul %11, %17, %cst_18 {dimension_numbers = #tpu.dot_dimension_numbers<[1], [0], [0], [1], [0, 0, 1, 1], [], []>} : vector<16x32xbf16>, vector<32x32xbf16>, vector<16x32xf32> -> vector<16x32xf32>
      %c0_19 = arith.constant 0 : index
      %c0_20 = arith.constant 0 : index
      %19 = vector.load %arg6[%c0_19, %c0_20] : memref<1x32xf32, #tpu.memory_space<vmem>>, vector<1x32xf32>
      %20 = vector.broadcast %19 : vector<1x32xf32> to vector<16x32xf32>
      %21 = arith.addf %18, %20 : vector<16x32xf32>
      %c0_21 = arith.constant 0 : index
      %c0_22 = arith.constant 0 : index
      %22 = vector.load %arg7[%c0_21, %c0_22] : memref<32x32xbf16, #tpu.memory_space<vmem>>, vector<32x32xbf16>
      %cst_23 = arith.constant dense<0.000000e+00> : vector<16x32xf32>
      %23 = tpu.matmul %11, %22, %cst_23 {dimension_numbers = #tpu.dot_dimension_numbers<[1], [0], [0], [1], [0, 0, 1, 1], [], []>} : vector<16x32xbf16>, vector<32x32xbf16>, vector<16x32xf32> -> vector<16x32xf32>
      %c0_24 = arith.constant 0 : index
      %c0_25 = arith.constant 0 : index
      %24 = vector.load %arg8[%c0_24, %c0_25] : memref<1x32xf32, #tpu.memory_space<vmem>>, vector<1x32xf32>
      %25 = vector.broadcast %24 : vector<1x32xf32> to vector<16x32xf32>
      %26 = arith.addf %23, %25 : vector<16x32xf32>
      %cst_26 = arith.constant 0.176776692 : f32
      %27 = vector.broadcast %cst_26 : f32 to vector<16x32xf32>
      %28 = arith.mulf %16, %27 : vector<16x32xf32>
      %29 = vector.shape_cast %28 : vector<16x32xf32> to vector<2x8x32xf32>
      %30 = arith.truncf %29 : vector<2x8x32xf32> to vector<2x8x32xbf16>
      %31 = vector.shape_cast %21 : vector<16x32xf32> to vector<2x8x32xf32>
      %32 = arith.truncf %31 : vector<2x8x32xf32> to vector<2x8x32xbf16>
      %33 = vector.shape_cast %26 : vector<16x32xf32> to vector<2x8x32xf32>
      %34 = arith.truncf %33 : vector<2x8x32xf32> to vector<2x8x32xbf16>
      "tpu.trace_start"() <{level = 10 : i32, message = "bqd,bkd->bqk"}> : () -> ()
      %cst_27 = arith.constant dense<0.000000e+00> : vector<2x8x8xf32>
      %35 = tpu.matmul %30, %32, %cst_27 {dimension_numbers = #tpu.dot_dimension_numbers<[2], [2], [1], [1], [0, 0, 0, 1, 1, 1], [0], [0]>} : vector<2x8x32xbf16>, vector<2x8x32xbf16>, vector<2x8x8xf32> -> vector<2x8x8xf32>
      "tpu.trace_stop"() : () -> ()
      %cst_28 = arith.constant dense<0xFF800000> : vector<2x8xf32>
      %36 = vector.multi_reduction <maximumf>, %35, %cst_28 [2] : vector<2x8x8xf32> to vector<2x8xf32>
      %37 = vector.shape_cast %36 : vector<2x8xf32> to vector<2x8x1xf32>
      %38 = vector.broadcast %37 : vector<2x8x1xf32> to vector<2x8x8xf32>
      %39 = arith.subf %35, %38 : vector<2x8x8xf32>
      %40 = math.exp %39 : vector<2x8x8xf32>
      %cst_29 = arith.constant dense<0.000000e+00> : vector<2x8xf32>
      %41 = vector.multi_reduction <add>, %40, %cst_29 [2] : vector<2x8x8xf32> to vector<2x8xf32>
      %42 = vector.shape_cast %41 : vector<2x8xf32> to vector<2x8x1xf32>
      %43 = tpu.reciprocal %42 {approx = true} : vector<2x8x1xf32> -> vector<2x8x1xf32>
      %44 = vector.broadcast %43 : vector<2x8x1xf32> to vector<2x8x8xf32>
      %45 = arith.mulf %40, %44 : vector<2x8x8xf32>
      %46 = arith.truncf %45 : vector<2x8x8xf32> to vector<2x8x8xbf16>
      "tpu.trace_start"() <{level = 10 : i32, message = "bqk,bkd->bqd"}> : () -> ()
      %cst_30 = arith.constant dense<0.000000e+00> : vector<2x8x32xf32>
      %47 = tpu.matmul %46, %34, %cst_30 {dimension_numbers = #tpu.dot_dimension_numbers<[2], [1], [1], [2], [0, 0, 0, 1, 1, 2], [0], [0]>} : vector<2x8x8xbf16>, vector<2x8x32xbf16>, vector<2x8x32xf32> -> vector<2x8x32xf32>
      "tpu.trace_stop"() : () -> ()
      %48 = vector.shape_cast %47 : vector<2x8x32xf32> to vector<16x32xf32>
      %49 = arith.truncf %48 : vector<16x32xf32> to vector<16x32xbf16>
      %c0_31 = arith.constant 0 : index
      %c0_32 = arith.constant 0 : index
      %50 = vector.load %arg9[%c0_31, %c0_32] : memref<32x32xbf16, #tpu.memory_space<vmem>>, vector<32x32xbf16>
      %cst_33 = arith.constant dense<0.000000e+00> : vector<16x32xf32>
      %51 = tpu.matmul %49, %50, %cst_33 {dimension_numbers = #tpu.dot_dimension_numbers<[1], [0], [0], [1], [0, 0, 1, 1], [], []>} : vector<16x32xbf16>, vector<32x32xbf16>, vector<16x32xf32> -> vector<16x32xf32>
      %c0_34 = arith.constant 0 : index
      %c0_35 = arith.constant 0 : index
      %52 = vector.load %arg10[%c0_34, %c0_35] : memref<1x32xf32, #tpu.memory_space<vmem>>, vector<1x32xf32>
      %53 = vector.broadcast %52 : vector<1x32xf32> to vector<16x32xf32>
      %54 = arith.addf %51, %53 : vector<16x32xf32>
      %cst_36 = arith.constant dense<0.000000e+00> : vector<16xf32>
      %55 = vector.multi_reduction <add>, %54, %cst_36 [1] : vector<16x32xf32> to vector<16xf32>
      %56 = vector.shape_cast %55 : vector<16xf32> to vector<16x1xf32>
      %cst_37 = arith.constant 3.200000e+01 : f32
      %57 = vector.broadcast %cst_37 : f32 to vector<16x1xf32>
      %58 = arith.divf %56, %57 : vector<16x1xf32>
      %59 = vector.broadcast %58 : vector<16x1xf32> to vector<16x32xf32>
      %60 = arith.subf %54, %59 : vector<16x32xf32>
      %61 = arith.mulf %60, %60 : vector<16x32xf32>
      %cst_38 = arith.constant dense<0.000000e+00> : vector<16xf32>
      %62 = vector.multi_reduction <add>, %61, %cst_38 [1] : vector<16x32xf32> to vector<16xf32>
      %63 = vector.shape_cast %62 : vector<16xf32> to vector<16x1xf32>
      %cst_39 = arith.constant 3.200000e+01 : f32
      %64 = vector.broadcast %cst_39 : f32 to vector<16x1xf32>
      %65 = arith.divf %63, %64 : vector<16x1xf32>
      %66 = vector.broadcast %58 : vector<16x1xf32> to vector<16x32xf32>
      %67 = arith.subf %54, %66 : vector<16x32xf32>
      %cst_40 = arith.constant 9.99999974E-6 : f32
      %68 = vector.broadcast %cst_40 : f32 to vector<16x1xf32>
      %69 = arith.addf %65, %68 : vector<16x1xf32>
      %70 = math.rsqrt %69 : vector<16x1xf32>
      %71 = vector.broadcast %70 : vector<16x1xf32> to vector<16x32xf32>
      %72 = arith.mulf %67, %71 : vector<16x32xf32>
      %c0_41 = arith.constant 0 : index
      %c0_42 = arith.constant 0 : index
      %73 = vector.load %arg11[%c0_41, %c0_42] : memref<1x32xf32, #tpu.memory_space<vmem>>, vector<1x32xf32>
      %74 = vector.broadcast %73 : vector<1x32xf32> to vector<16x32xf32>
      %75 = arith.mulf %72, %74 : vector<16x32xf32>
      %c0_43 = arith.constant 0 : index
      %c0_44 = arith.constant 0 : index
      %76 = vector.load %arg12[%c0_43, %c0_44] : memref<1x32xf32, #tpu.memory_space<vmem>>, vector<1x32xf32>
      %77 = vector.broadcast %76 : vector<1x32xf32> to vector<16x32xf32>
      %78 = arith.addf %75, %77 : vector<16x32xf32>
      %79 = arith.truncf %78 : vector<16x32xf32> to vector<16x32xbf16>
      %c0_45 = arith.constant 0 : index
      %c0_46 = arith.constant 0 : index
      %80 = vector.load %arg16[%c0_45, %c0_46] : memref<16x32xbf16, #tpu.memory_space<vmem>>, vector<16x32xbf16>
      tpu.vector_store %arg16[%c0_45, %c0_46], %79 {strides = array<i32>} : memref<16x32xbf16, #tpu.memory_space<vmem>>, vector<16x32xbf16>,
    } else {
    }
    %c0 = arith.constant 0 : index
    %c0_1 = arith.constant 0 : index
    %3 = vector.load %arg16[%c0, %c0_1] : memref<16x32xbf16, #tpu.memory_space<vmem>>, vector<16x32xbf16>
    %c0_2 = arith.constant 0 : index
    %c0_3 = arith.constant 0 : index
    %4 = vector.load %arg13[%c0_2, %c0_3] : memref<32x512xbf16, #tpu.memory_space<vmem>>, vector<32x512xbf16>
    %cst = arith.constant dense<0.000000e+00> : vector<16x512xf32>
    %5 = tpu.matmul %3, %4, %cst {dimension_numbers = #tpu.dot_dimension_numbers<[1], [0], [0], [1], [0, 0, 1, 1], [], []>} : vector<16x32xbf16>, vector<32x512xbf16>, vector<16x512xf32> -> vector<16x512xf32>
    %c0_4 = arith.constant 0 : index
    %c0_5 = arith.constant 0 : index
    %6 = vector.load %arg14[%c0_4, %c0_5] : memref<1x512xf32, #tpu.memory_space<vmem>>, vector<1x512xf32>
    %7 = vector.broadcast %6 : vector<1x512xf32> to vector<16x512xf32>
    %8 = arith.addf %5, %7 : vector<16x512xf32>
    %c0_6 = arith.constant 0 : index
    %c0_7 = arith.constant 0 : index
    %9 = vector.load %arg15[%c0_6, %c0_7] : memref<16x512xf32, #tpu.memory_space<vmem>>, vector<16x512xf32>
    tpu.vector_store %arg15[%c0_6, %c0_7], %8 {strides = array<i32>} : memref<16x512xf32, #tpu.memory_space<vmem>>, vector<16x512xf32>,
    return
  }
  func.func @transform_0(%arg0: i32, %arg1: i32) -> (i32, i32, i32) {
    %c0_i32 = arith.constant 0 : i32
    %c0_i32_0 = arith.constant 0 : i32
    %c0_i32_1 = arith.constant 0 : i32
    return %arg0, %c0_i32, %c0_i32_0 : i32, i32, i32
  }
  func.func @transform_1(%arg0: i32, %arg1: i32) -> (i32, i32) {
    %c0_i32 = arith.constant 0 : i32
    %c0_i32_0 = arith.constant 0 : i32
    %c0_i32_1 = arith.constant 0 : i32
    return %c0_i32, %c0_i32_0 : i32, i32
  }
  func.func @transform_2(%arg0: i32, %arg1: i32) -> (i32, i32) {
    %c0_i32 = arith.constant 0 : i32
    %c0_i32_0 = arith.constant 0 : i32
    %c0_i32_1 = arith.constant 0 : i32
    return %c0_i32, %c0_i32_0 : i32, i32
  }
  func.func @transform_3(%arg0: i32, %arg1: i32) -> (i32, i32) {
    %c0_i32 = arith.constant 0 : i32
    %c0_i32_0 = arith.constant 0 : i32
    %c0_i32_1 = arith.constant 0 : i32
    return %c0_i32, %c0_i32_0 : i32, i32
  }
  func.func @transform_4(%arg0: i32, %arg1: i32) -> (i32, i32) {
    %c0_i32 = arith.constant 0 : i32
    %c0_i32_0 = arith.constant 0 : i32
    %c0_i32_1 = arith.constant 0 : i32
    return %c0_i32, %c0_i32_0 : i32, i32
  }
  func.func @transform_5(%arg0: i32, %arg1: i32) -> (i32, i32) {
    %c0_i32 = arith.constant 0 : i32
    %c0_i32_0 = arith.constant 0 : i32
    %c0_i32_1 = arith.constant 0 : i32
    return %c0_i32, %c0_i32_0 : i32, i32
  }
  func.func @transform_6(%arg0: i32, %arg1: i32) -> (i32, i32) {
    %c0_i32 = arith.constant 0 : i32
    %c0_i32_0 = arith.constant 0 : i32
    %c0_i32_1 = arith.constant 0 : i32
    return %c0_i32, %c0_i32_0 : i32, i32
  }
  func.func @transform_7(%arg0: i32, %arg1: i32) -> (i32, i32) {
    %c0_i32 = arith.constant 0 : i32
    %c0_i32_0 = arith.constant 0 : i32
    %c0_i32_1 = arith.constant 0 : i32
    return %c0_i32, %c0_i32_0 : i32, i32
  }
  func.func @transform_8(%arg0: i32, %arg1: i32) -> (i32, i32) {
    %c0_i32 = arith.constant 0 : i32
    %c0_i32_0 = arith.constant 0 : i32
    %c0_i32_1 = arith.constant 0 : i32
    return %c0_i32, %c0_i32_0 : i32, i32
  }
  func.func @transform_9(%arg0: i32, %arg1: i32) -> (i32, i32) {
    %c0_i32 = arith.constant 0 : i32
    %c0_i32_0 = arith.constant 0 : i32
    %c0_i32_1 = arith.constant 0 : i32
    return %c0_i32, %c0_i32_0 : i32, i32
  }
  func.func @transform_10(%arg0: i32, %arg1: i32) -> (i32, i32) {
    %c0_i32 = arith.constant 0 : i32
    %c0_i32_0 = arith.constant 0 : i32
    %c0_i32_1 = arith.constant 0 : i32
    return %c0_i32, %c0_i32_0 : i32, i32
  }
  func.func @transform_11(%arg0: i32, %arg1: i32) -> (i32, i32) {
    %c0_i32 = arith.constant 0 : i32
    %c0_i32_0 = arith.constant 0 : i32
    return %c0_i32, %arg1 : i32, i32
  }
  func.func @transform_12(%arg0: i32, %arg1: i32) -> (i32, i32) {
    %c0_i32 = arith.constant 0 : i32
    %c0_i32_0 = arith.constant 0 : i32
    return %c0_i32, %arg1 : i32, i32
  }
  func.func @transform_13(%arg0: i32, %arg1: i32) -> (i32, i32) {
    %c0_i32 = arith.constant 0 : i32
    return %arg0, %arg1 : i32, i32
  }
}

</mosaic_0001>

<llo_original>
// kernel: tpu_custom_call.1
$region0: #{tpu_custom_call.1}
  #allocation0 [shape = 'u32[]', space=smem, size = 0x4, offset = 0x4, fixed_abs, tag = 'smem constant byte address 0x4 - core index']
  #allocation1 [shape = 'u32[144,128]{1,0:T(1,128)}', space=vmem, size = 0x12000, scoped, tag = 'internal scratch']
  #allocation2 [shape = 'bf16[16,32]{1,0:T(16,128)(2,1)}', space=vmem, size = 0x1000, scoped, tag = 'scratch operand']
  %s0 = inlined_call_operand.hbm [shape: bf16[2,8,32], index: 0, kind: input, shape index: {}]
  %s1 = inlined_call_operand.hbm [shape: bf16[32,32], index: 1, kind: input, shape index: {}]
  %s2 = inlined_call_operand.vmem [shape: f32[1,32], index: 2, kind: input, shape index: {}]
  %s3 = inlined_call_operand.hbm [shape: bf16[32,32], index: 3, kind: input, shape index: {}]
  %s4 = inlined_call_operand.vmem [shape: f32[1,32], index: 4, kind: input, shape index: {}]
  %s5 = inlined_call_operand.vmem [shape: bf16[32,32], index: 5, kind: input, shape index: {}]
  %s6 = inlined_call_operand.hbm [shape: f32[1,32], index: 6, kind: input, shape index: {}]
  %s7 = inlined_call_operand.hbm [shape: bf16[32,32], index: 7, kind: input, shape index: {}]
  %s8 = inlined_call_operand.vmem [shape: f32[1,32], index: 8, kind: input, shape index: {}]
  %s9 = inlined_call_operand.vmem [shape: f32[1,32], index: 9, kind: input, shape index: {}]
  %s10 = inlined_call_operand.vmem [shape: f32[1,32], index: 10, kind: input, shape index: {}]
  %s11 = inlined_call_operand.hbm [shape: bf16[32,512], index: 11, kind: input, shape index: {}]
  %s12 = inlined_call_operand.vmem [shape: f32[1,512], index: 12, kind: input, shape index: {}]
  %s13 = inlined_call_operand.hbm [shape: f32[16,512], index: 13, kind: output, shape index: {}]
  %s14 = sld [smem:[#allocation0]]
  $region90: #{tpu_custom_call.1} parent=0
    _
  %s16 = ssub.s32 1, %s14
  %s17 = scalar_select 0, %s16, %s14
  $region1: #{tpu_custom_call.1} parent=0
    #allocation3 [shape = 'u8[4096]{0}', space=vmem, size = 0x1000, scoped, tag = 'input window, operand 0, single buffered']
    #allocation4 [shape = 's32[1]{0}', space=sflag, size = 0x4, scoped, tag = 'scoped memory for tpu_custom_call.1']
    #allocation5 [shape = 's32[1]{0}', space=sflag, size = 0x4, scoped, tag = 'scoped memory for tpu_custom_call.1']
    #allocation6 [shape = 'u8[8192]{0}', space=vmem, size = 0x2000, scoped, tag = 'input window, operand 1, single buffered']
    #allocation7 [shape = 's32[1]{0}', space=sflag, size = 0x4, scoped, tag = 'scoped memory for tpu_custom_call.1']
    #allocation8 [shape = 'u8[8192]{0}', space=vmem, size = 0x2000, scoped, tag = 'input window, operand 3, single buffered']
    #allocation9 [shape = 'u8[512]{0}', space=vmem, size = 0x400, scoped, tag = 'input window, operand 6, single buffered']
    #allocation10 [shape = 's32[1]{0}', space=sflag, size = 0x4, scoped, tag = 'scoped memory for tpu_custom_call.1']
    #allocation11 [shape = 'u8[8192]{0}', space=vmem, size = 0x2000, scoped, tag = 'input window, operand 7, single buffered']
    #allocation12 [shape = 'u8[32768]{0}', space=vmem, size = 0x8000, scoped, tag = 'input window, operand 11, single buffered']
    #allocation13 [shape = 's32[1]{0}', space=sflag, size = 0x4, scoped, tag = 'scoped memory for tpu_custom_call.1']
    #allocation14 [shape = 'u8[32768]{0}', space=vmem, size = 0x8000, scoped, tag = 'output window, operand 0, single buffered']
    %18 = vsyncpa [#allocation4], 0
    %19 = vsyncpa [#allocation7], 0
    %20 = vsyncpa [#allocation10], 0
    %21 = vsyncpa [#allocation13], 0
    %22 = vsyncpa [#allocation5], 0
    // Predicated region
    $region2: #{tpu_custom_call.1} parent=1 // pred_check
      _
    $region3: #{tpu_custom_call.1} parent=1 // pred_check_branch
      %24 = sbr.rel (0) target = $region5
    $region4: #{tpu_custom_call.1} parent=1 // pred_region
      %s26 = ssub.s32 128, 128
      %27 = vsyncadd [#allocation4], %s26
      %s28 = sshll.u32 [#allocation3], 4
      %s29 = int_to_ptr.vmem [resolvable:$true] %s28
      %34 = dma.hbm_to_vmem [thread:$0]  %s0, 128, %s29, [#allocation4], 64, 64, 4
    $region5: #{tpu_custom_call.1} parent=1 // pred_fallthru
      _
    // Predicated region
    $region6: #{tpu_custom_call.1} parent=1 // pred_check
      _
    $region7: #{tpu_custom_call.1} parent=1 // pred_check_branch
      %36 = sbr.rel (0) target = $region9
    $region8: #{tpu_custom_call.1} parent=1 // pred_region
      %s38 = ssub.s32 256, 256
      %39 = vsyncadd [#allocation7], %s38
      %s40 = sshll.u32 [#allocation6], 4
      %s41 = int_to_ptr.vmem [resolvable:$true] %s40
      %46 = dma.hbm_to_vmem [thread:$0]  %s1, 256, %s41, [#allocation7], 64, 64, 4
    $region9: #{tpu_custom_call.1} parent=1 // pred_fallthru
      _
    // Predicated region
    $region10: #{tpu_custom_call.1} parent=1 // pred_check
      _
    $region11: #{tpu_custom_call.1} parent=1 // pred_check_branch
      %48 = sbr.rel (0) target = $region13
    $region12: #{tpu_custom_call.1} parent=1 // pred_region
      _
    $region13: #{tpu_custom_call.1} parent=1 // pred_fallthru
      _
    // Predicated region
    $region14: #{tpu_custom_call.1} parent=1 // pred_check
      _
    $region15: #{tpu_custom_call.1} parent=1 // pred_check_branch
      %50 = sbr.rel (0) target = $region17
    $region16: #{tpu_custom_call.1} parent=1 // pred_region
      %s52 = ssub.s32 256, 256
      %53 = vsyncadd [#allocation7], %s52
      %s54 = sshll.u32 [#allocation8], 4
      %s55 = int_to_ptr.vmem [resolvable:$true] %s54
      %60 = dma.hbm_to_vmem [thread:$0]  %s3, 256, %s55, [#allocation7], 64, 64, 4
    $region17: #{tpu_custom_call.1} parent=1 // pred_fallthru
      _
    // Predicated region
    $region18: #{tpu_custom_call.1} parent=1 // pred_check
      _
    $region19: #{tpu_custom_call.1} parent=1 // pred_check_branch
      %62 = sbr.rel (0) target = $region21
    $region20: #{tpu_custom_call.1} parent=1 // pred_region
      _
    $region21: #{tpu_custom_call.1} parent=1 // pred_fallthru
      _
    // Predicated region
    $region22: #{tpu_custom_call.1} parent=1 // pred_check
      _
    $region23: #{tpu_custom_call.1} parent=1 // pred_check_branch
      %64 = sbr.rel (0) target = $region25
    $region24: #{tpu_custom_call.1} parent=1 // pred_region
      _
    $region25: #{tpu_custom_call.1} parent=1 // pred_fallthru
      _
    // Predicated region
    $region26: #{tpu_custom_call.1} parent=1 // pred_check
      _
    $region27: #{tpu_custom_call.1} parent=1 // pred_check_branch
      %66 = sbr.rel (0) target = $region29
    $region28: #{tpu_custom_call.1} parent=1 // pred_region
      %s68 = ssub.s32 16, 16
      %69 = vsyncadd [#allocation10], %s68
      %s71 = sshll.u32 [#allocation9], 4
      %s72 = int_to_ptr.vmem [resolvable:$true] %s71
      %74 = dma.hbm_to_vmem [thread:$0]  %s6, 16, %s72, [#allocation10]
    $region29: #{tpu_custom_call.1} parent=1 // pred_fallthru
      _
    // Predicated region
    $region30: #{tpu_custom_call.1} parent=1 // pred_check
      _
    $region31: #{tpu_custom_call.1} parent=1 // pred_check_branch
      %76 = sbr.rel (0) target = $region33
    $region32: #{tpu_custom_call.1} parent=1 // pred_region
      %s78 = ssub.s32 256, 256
      %79 = vsyncadd [#allocation10], %s78
      %s80 = sshll.u32 [#allocation11], 4
      %s81 = int_to_ptr.vmem [resolvable:$true] %s80
      %86 = dma.hbm_to_vmem [thread:$0]  %s7, 256, %s81, [#allocation10], 64, 64, 4
    $region33: #{tpu_custom_call.1} parent=1 // pred_fallthru
      _
    // Predicated region
    $region34: #{tpu_custom_call.1} parent=1 // pred_check
      _
    $region35: #{tpu_custom_call.1} parent=1 // pred_check_branch
      %88 = sbr.rel (0) target = $region37
    $region36: #{tpu_custom_call.1} parent=1 // pred_region
      _
    $region37: #{tpu_custom_call.1} parent=1 // pred_fallthru
      _
    // Predicated region
    $region38: #{tpu_custom_call.1} parent=1 // pred_check
      _
    $region39: #{tpu_custom_call.1} parent=1 // pred_check_branch
      %90 = sbr.rel (0) target = $region41
    $region40: #{tpu_custom_call.1} parent=1 // pred_region
      _
    $region41: #{tpu_custom_call.1} parent=1 // pred_fallthru
      _
    // Predicated region
    $region42: #{tpu_custom_call.1} parent=1 // pred_check
      _
    $region43: #{tpu_custom_call.1} parent=1 // pred_check_branch
      %92 = sbr.rel (0) target = $region45
    $region44: #{tpu_custom_call.1} parent=1 // pred_region
      _
    $region45: #{tpu_custom_call.1} parent=1 // pred_fallthru
      _
    // Predicated region
    $region46: #{tpu_custom_call.1} parent=1 // pred_check
      _
    $region47: #{tpu_custom_call.1} parent=1 // pred_check_branch
      %94 = sbr.rel (0) target = $region49
    $region48: #{tpu_custom_call.1} parent=1 // pred_region
      %s96 = ssub.s32 1024, 1024
      %97 = vsyncadd [#allocation13], %s96
      %s98 = sshll.u32 [#allocation12], 4
      %s99 = int_to_ptr.vmem [resolvable:$true] %s98
      %104 = dma.hbm_to_vmem [thread:$0]  %s11, 1024, %s99, [#allocation13], 256, 256, 16
    $region49: #{tpu_custom_call.1} parent=1 // pred_fallthru
      _
    // Predicated region
    $region50: #{tpu_custom_call.1} parent=1 // pred_check
      _
    $region51: #{tpu_custom_call.1} parent=1 // pred_check_branch
      %106 = sbr.rel (0) target = $region53
    $region52: #{tpu_custom_call.1} parent=1 // pred_region
      _
    $region53: #{tpu_custom_call.1} parent=1 // pred_fallthru
      _
    // Predicated region
    $region54: #{tpu_custom_call.1} parent=1 // pred_check
      _
    $region55: #{tpu_custom_call.1} parent=1 // pred_check_branch
      %108 = sbr.rel (0) target = $region57
    $region56: #{tpu_custom_call.1} parent=1 // pred_region
      %109 = dma.done [#allocation4], 128
    $region57: #{tpu_custom_call.1} parent=1 // pred_fallthru
      _
    // Predicated region
    $region58: #{tpu_custom_call.1} parent=1 // pred_check
      _
    $region59: #{tpu_custom_call.1} parent=1 // pred_check_branch
      %111 = sbr.rel (0) target = $region61
    $region60: #{tpu_custom_call.1} parent=1 // pred_region
      %112 = dma.done [#allocation7], 256
    $region61: #{tpu_custom_call.1} parent=1 // pred_fallthru
      _
    // Predicated region
    $region62: #{tpu_custom_call.1} parent=1 // pred_check
      _
    $region63: #{tpu_custom_call.1} parent=1 // pred_check_branch
      %114 = sbr.rel (0) target = $region65
    $region64: #{tpu_custom_call.1} parent=1 // pred_region
      %115 = dma.done [#allocation7], 256
    $region65: #{tpu_custom_call.1} parent=1 // pred_fallthru
      _
    // Predicated region
    $region66: #{tpu_custom_call.1} parent=1 // pred_check
      _
    $region67: #{tpu_custom_call.1} parent=1 // pred_check_branch
      %117 = sbr.rel (0) target = $region69
    $region68: #{tpu_custom_call.1} parent=1 // pred_region
      %118 = dma.done [#allocation10], 16
    $region69: #{tpu_custom_call.1} parent=1 // pred_fallthru
      _
    // Predicated region
    $region70: #{tpu_custom_call.1} parent=1 // pred_check
      _
    $region71: #{tpu_custom_call.1} parent=1 // pred_check_branch
      %120 = sbr.rel (0) target = $region73
    $region72: #{tpu_custom_call.1} parent=1 // pred_region
      %121 = dma.done [#allocation10], 256
    $region73: #{tpu_custom_call.1} parent=1 // pred_fallthru
      _
    // Predicated region
    $region74: #{tpu_custom_call.1} parent=1 // pred_check
      _
    $region75: #{tpu_custom_call.1} parent=1 // pred_check_branch
      %123 = sbr.rel (0) target = $region77
    $region76: #{tpu_custom_call.1} parent=1 // pred_region
      %124 = dma.done [#allocation13], 1024
    $region77: #{tpu_custom_call.1} parent=1 // pred_fallthru
      _
    %p126 = scmp.eq.s32.totalorder 0, 0
    // Predicated region
    $region78: #{tpu_custom_call.1} parent=1 // pred_check
      %p127 = pneg %p126
    $region79: #{tpu_custom_call.1} parent=1 // pred_check_branch
      %129 = sbr.rel (%p127) target = $region81
    $region80: #{tpu_custom_call.1} parent=1 // pred_region
      %v130 = vld [vmem:[#allocation3] sm:$0xf]
      %v131 = vld [vmem:[#allocation3 + $0x4] sm:$0xf]
      %v132 = vld [vmem:[#allocation6] sm:$0xf]
      %v133 = vld [vmem:[#allocation6 + $0x4] sm:$0xf]
      %v134 = vld [vmem:[#allocation6 + $0x8] sm:$0xf]
      %v135 = vld [vmem:[#allocation6 + $0xc] sm:$0xf]
      %v136 = vld [vmem:[%s2] sm:$0x1]
      %v138 = vlaneseq
      %v139 = vshrl.u32 %v138, 7
      %v140 = vsub.s32 0, %v139
      %v141 = vrot.slane %v136, %v140
      %v145 = vunpack.c.l.b16 %v130
      %v146 = vunpack.c.l.b16 %v131
      %v147 = vpack.c.b16 %v146, %v145
      %v152 = vunpack.c.l.b16 %v132
      %v153 = vunpack.c.l.b16 %v133
      %v154 = vunpack.c.l.b16 %v134
      %v155 = vunpack.c.l.b16 %v135
      %v156 = vpack.c.b16 %v153, %v152
      %v157 = vpack.c.b16 %v155, %v154
      %vm160 = vcmask 261120
      %v162 = vsel %vm160, %v147, 0
      %164 = vmatprep.subr.bf16.mxu0 0
      %165 = vmatpush1.bf16.msra.mxu0 %v156
      %166 = vmatprep.subr.bf16.mxu0 0
      %167 = vmatpush1.bf16.msra.mxu0 %v157
      %168 = vmatprep.subr.bf16.mxu0 0
      %169 = vmatpush1.bf16.msra.mxu0 0
      %170 = vmatprep.subr.bf16.mxu0 0
      %171 = vmatpush1.bf16.msra.mxu0 0
      %172 = vmatprep.subr.bf16.mxu0 0
      %173 = vmatpush1.bf16.msra.mxu0 0
      %174 = vmatprep.subr.bf16.mxu0 0
      %175 = vmatpush1.bf16.msra.mxu0 0
      %176 = vmatprep.subr.bf16.mxu0 0
      %177 = vmatpush1.bf16.msra.mxu0 0
      %178 = vmatprep.subr.bf16.mxu0 0
      %179 = vmatpush1.bf16.msra.mxu0 0
      %180 = vmatprep.subr.bf16.mxu0 0
      %181 = vmatpush1.bf16.msra.mxu0 0
      %182 = vmatprep.subr.bf16.mxu0 0
      %183 = vmatpush1.bf16.msra.mxu0 0
      %184 = vmatprep.subr.bf16.mxu0 0
      %185 = vmatpush1.bf16.msra.mxu0 0
      %186 = vmatprep.subr.bf16.mxu0 0
      %187 = vmatpush1.bf16.msra.mxu0 0
      %188 = vmatprep.subr.bf16.mxu0 0
      %189 = vmatpush1.bf16.msra.mxu0 0
      %190 = vmatprep.subr.bf16.mxu0 0
      %191 = vmatpush1.bf16.msra.mxu0 0
      %192 = vmatprep.subr.bf16.mxu0 0
      %193 = vmatpush1.bf16.msra.mxu0 0
      %194 = vmatprep.subr.bf16.mxu0 0
      %195 = vmatpush1.bf16.msra.mxu0 0
      %196 = vmatprep.mubr.bf16.mxu0 0
      %197 = vmatmul.mubr.bf16.gmra.mrb[0].mxu0 %v162
      %v198 = vpop.f32.mrb[0].mxu0
      %v199 = vadd.f32 %v141, %v198
      %v200 = vpop.f32.mrb[0].mxu0
      %v201 = vpop.f32.mrb[0].mxu0
      %v202 = vadd.f32 %v141, %v201
      %v203 = vpop.f32.mrb[0].mxu0
      %204 = vdwg.mxu0
      %v205 = vld [vmem:[#allocation8] sm:$0xf]
      %v206 = vld [vmem:[#allocation8 + $0x4] sm:$0xf]
      %v207 = vld [vmem:[#allocation8 + $0x8] sm:$0xf]
      %v208 = vld [vmem:[#allocation8 + $0xc] sm:$0xf]
      %v209 = vld [vmem:[%s4] sm:$0x1]
      %v211 = vlaneseq
      %v212 = vshrl.u32 %v211, 7
      %v213 = vsub.s32 0, %v212
      %v214 = vrot.slane %v209, %v213
      %v220 = vunpack.c.l.b16 %v205
      %v221 = vunpack.c.l.b16 %v206
      %v222 = vunpack.c.l.b16 %v207
      %v223 = vunpack.c.l.b16 %v208
      %v224 = vpack.c.b16 %v221, %v220
      %v225 = vpack.c.b16 %v223, %v222
      %228 = vmatprep.subr.bf16.mxu0 0
      %229 = vmatpush1.bf16.msra.mxu0 %v224
      %230 = vmatprep.subr.bf16.mxu0 0
      %231 = vmatpush1.bf16.msra.mxu0 %v225
      %232 = vmatprep.subr.bf16.mxu0 0
      %233 = vmatpush1.bf16.msra.mxu0 0
      %234 = vmatprep.subr.bf16.mxu0 0
      %235 = vmatpush1.bf16.msra.mxu0 0
      %236 = vmatprep.subr.bf16.mxu0 0
      %237 = vmatpush1.bf16.msra.mxu0 0
      %238 = vmatprep.subr.bf16.mxu0 0
      %239 = vmatpush1.bf16.msra.mxu0 0
      %240 = vmatprep.subr.bf16.mxu0 0
      %241 = vmatpush1.bf16.msra.mxu0 0
      %242 = vmatprep.subr.bf16.mxu0 0
      %243 = vmatpush1.bf16.msra.mxu0 0
      %244 = vmatprep.subr.bf16.mxu0 0
      %245 = vmatpush1.bf16.msra.mxu0 0
      %246 = vmatprep.subr.bf16.mxu0 0
      %247 = vmatpush1.bf16.msra.mxu0 0
      %248 = vmatprep.subr.bf16.mxu0 0
      %249 = vmatpush1.bf16.msra.mxu0 0
      %250 = vmatprep.subr.bf16.mxu0 0
      %251 = vmatpush1.bf16.msra.mxu0 0
      %252 = vmatprep.subr.bf16.mxu0 0
      %253 = vmatpush1.bf16.msra.mxu0 0
      %254 = vmatprep.subr.bf16.mxu0 0
      %255 = vmatpush1.bf16.msra.mxu0 0
      %256 = vmatprep.subr.bf16.mxu0 0
      %257 = vmatpush1.bf16.msra.mxu0 0
      %258 = vmatprep.subr.bf16.mxu0 0
      %259 = vmatpush1.bf16.msra.mxu0 0
      %260 = vmatprep.mubr.bf16.mxu0 0
      %261 = vmatmul.mubr.bf16.gmra.mrb[0].mxu0 %v162
      %v262 = vpop.f32.mrb[0].mxu0
      %v263 = vadd.f32 %v214, %v262
      %v264 = vpop.f32.mrb[0].mxu0
      %v265 = vpop.f32.mrb[0].mxu0
      %v266 = vadd.f32 %v214, %v265
      %v267 = vpop.f32.mrb[0].mxu0
      %268 = vdwg.mxu0
      %v269 = vld [vmem:[%s5] sm:$0xf]
      %v270 = vld [vmem:[%s5 + $0x4] sm:$0xf]
      %v271 = vld [vmem:[%s5 + $0x8] sm:$0xf]
      %v272 = vld [vmem:[%s5 + $0xc] sm:$0xf]
      %v273 = vld [vmem:[#allocation9] sm:$0x1]
      %v275 = vlaneseq
      %v276 = vshrl.u32 %v275, 7
      %v277 = vsub.s32 0, %v276
      %v278 = vrot.slane %v273, %v277
      %v284 = vunpack.c.l.b16 %v269
      %v285 = vunpack.c.l.b16 %v270
      %v286 = vunpack.c.l.b16 %v271
      %v287 = vunpack.c.l.b16 %v272
      %v288 = vpack.c.b16 %v285, %v284
      %v289 = vpack.c.b16 %v287, %v286
      %292 = vmatprep.subr.bf16.mxu0 0
      %293 = vmatpush1.bf16.msra.mxu0 %v288
      %294 = vmatprep.subr.bf16.mxu0 0
      %295 = vmatpush1.bf16.msra.mxu0 %v289
      %296 = vmatprep.subr.bf16.mxu0 0
      %297 = vmatpush1.bf16.msra.mxu0 0
      %298 = vmatprep.subr.bf16.mxu0 0
      %299 = vmatpush1.bf16.msra.mxu0 0
      %300 = vmatprep.subr.bf16.mxu0 0
      %301 = vmatpush1.bf16.msra.mxu0 0
      %302 = vmatprep.subr.bf16.mxu0 0
      %303 = vmatpush1.bf16.msra.mxu0 0
      %304 = vmatprep.subr.bf16.mxu0 0
      %305 = vmatpush1.bf16.msra.mxu0 0
      %306 = vmatprep.subr.bf16.mxu0 0
      %307 = vmatpush1.bf16.msra.mxu0 0
      %308 = vmatprep.subr.bf16.mxu0 0
      %309 = vmatpush1.bf16.msra.mxu0 0
      %310 = vmatprep.subr.bf16.mxu0 0
      %311 = vmatpush1.bf16.msra.mxu0 0
      %312 = vmatprep.subr.bf16.mxu0 0
      %313 = vmatpush1.bf16.msra.mxu0 0
      %314 = vmatprep.subr.bf16.mxu0 0
      %315 = vmatpush1.bf16.msra.mxu0 0
      %316 = vmatprep.subr.bf16.mxu0 0
      %317 = vmatpush1.bf16.msra.mxu0 0
      %318 = vmatprep.subr.bf16.mxu0 0
      %319 = vmatpush1.bf16.msra.mxu0 0
      %320 = vmatprep.subr.bf16.mxu0 0
      %321 = vmatpush1.bf16.msra.mxu0 0
      %322 = vmatprep.subr.bf16.mxu0 0
      %323 = vmatpush1.bf16.msra.mxu0 0
      %324 = vmatprep.mubr.bf16.mxu0 0
      %325 = vmatmul.mubr.bf16.gmra.mrb[0].mxu0 %v162
      %v326 = vpop.f32.mrb[0].mxu0
      %v327 = vadd.f32 %v278, %v326
      %v328 = vpop.f32.mrb[0].mxu0
      %v329 = vpop.f32.mrb[0].mxu0
      %v330 = vadd.f32 %v278, %v329
      %v331 = vpop.f32.mrb[0].mxu0
      %332 = vdwg.mxu0
      %v333 = vmul.f32 %v199, 0.17677669
      %v334 = vmul.f32 %v202, 0.17677669
      %v335 = vpack.c.bf16 %v333, %v333
      %v336 = vpack.c.bf16 %v334, %v334
      %v337 = vpack.c.bf16 %v263, %v263
      %v338 = vpack.c.bf16 %v266, %v266
      %v339 = vpack.c.bf16 %v327, %v327
      %v340 = vpack.c.bf16 %v330, %v330
      %v342 = vsel %vm160, %v335, 0
      %v345 = vsel %vm160, %v337, 0
      %347 = vmatprep.subr.bf16.mxu0 0
      %348 = vmatpush1.bf16.xpose.msra.mxu0 %v345
      %349 = vmatprep.subr.bf16.mxu0 0
      %350 = vmatpush1.bf16.xpose.msra.mxu0 0
      %351 = vmatprep.subr.bf16.mxu0 0
      %352 = vmatpush1.bf16.xpose.msra.mxu0 0
      %353 = vmatprep.subr.bf16.mxu0 0
      %354 = vmatpush1.bf16.xpose.msra.mxu0 0
      %355 = vmatprep.subr.bf16.mxu0 0
      %356 = vmatpush1.bf16.xpose.msra.mxu0 0
      %357 = vmatprep.subr.bf16.mxu0 0
      %358 = vmatpush1.bf16.xpose.msra.mxu0 0
      %359 = vmatprep.subr.bf16.mxu0 0
      %360 = vmatpush1.bf16.xpose.msra.mxu0 0
      %361 = vmatprep.subr.bf16.mxu0 0
      %362 = vmatpush1.bf16.xpose.msra.mxu0 0
      %363 = vmatprep.subr.bf16.mxu0 0
      %364 = vmatpush1.bf16.xpose.msra.mxu0 0
      %365 = vmatprep.subr.bf16.mxu0 0
      %366 = vmatpush1.bf16.xpose.msra.mxu0 0
      %367 = vmatprep.subr.bf16.mxu0 0
      %368 = vmatpush1.bf16.xpose.msra.mxu0 0
      %369 = vmatprep.subr.bf16.mxu0 0
      %370 = vmatpush1.bf16.xpose.msra.mxu0 0
      %371 = vmatprep.subr.bf16.mxu0 0
      %372 = vmatpush1.bf16.xpose.msra.mxu0 0
      %373 = vmatprep.subr.bf16.mxu0 0
      %374 = vmatpush1.bf16.xpose.msra.mxu0 0
      %375 = vmatprep.subr.bf16.mxu0 0
      %376 = vmatpush1.bf16.xpose.msra.mxu0 0
      %377 = vmatprep.subr.bf16.mxu0 0
      %378 = vmatpush1.bf16.xpose.msra.mxu0 0
      %379 = vmatprep.mubr.bf16.mxu0 0
      %380 = vmatmul.mubr.bf16.gmra.mrb[0].mxu0 %v342
      %v381 = vpop.f32.mrb[0].mxu0
      %v382 = vadd.f32 0.0, %v381
      %v383 = vpop.f32.mrb[0].mxu0
      %v384 = vpop.f32.mrb[0].mxu0
      %v385 = vpop.f32.mrb[0].mxu0
      %386 = vdwg.mxu0
      %v388 = vsel %vm160, %v336, 0
      %v391 = vsel %vm160, %v338, 0
      %393 = vmatprep.subr.bf16.mxu0 0
      %394 = vmatpush1.bf16.xpose.msra.mxu0 %v391
      %395 = vmatprep.subr.bf16.mxu0 0
      %396 = vmatpush1.bf16.xpose.msra.mxu0 0
      %397 = vmatprep.subr.bf16.mxu0 0
      %398 = vmatpush1.bf16.xpose.msra.mxu0 0
      %399 = vmatprep.subr.bf16.mxu0 0
      %400 = vmatpush1.bf16.xpose.msra.mxu0 0
      %401 = vmatprep.subr.bf16.mxu0 0
      %402 = vmatpush1.bf16.xpose.msra.mxu0 0
      %403 = vmatprep.subr.bf16.mxu0 0
      %404 = vmatpush1.bf16.xpose.msra.mxu0 0
      %405 = vmatprep.subr.bf16.mxu0 0
      %406 = vmatpush1.bf16.xpose.msra.mxu0 0
      %407 = vmatprep.subr.bf16.mxu0 0
      %408 = vmatpush1.bf16.xpose.msra.mxu0 0
      %409 = vmatprep.subr.bf16.mxu0 0
      %410 = vmatpush1.bf16.xpose.msra.mxu0 0
      %411 = vmatprep.subr.bf16.mxu0 0
      %412 = vmatpush1.bf16.xpose.msra.mxu0 0
      %413 = vmatprep.subr.bf16.mxu0 0
      %414 = vmatpush1.bf16.xpose.msra.mxu0 0
      %415 = vmatprep.subr.bf16.mxu0 0
      %416 = vmatpush1.bf16.xpose.msra.mxu0 0
      %417 = vmatprep.subr.bf16.mxu0 0
      %418 = vmatpush1.bf16.xpose.msra.mxu0 0
      %419 = vmatprep.subr.bf16.mxu0 0
      %420 = vmatpush1.bf16.xpose.msra.mxu0 0
      %421 = vmatprep.subr.bf16.mxu0 0
      %422 = vmatpush1.bf16.xpose.msra.mxu0 0
      %423 = vmatprep.subr.bf16.mxu0 0
      %424 = vmatpush1.bf16.xpose.msra.mxu0 0
      %425 = vmatprep.mubr.bf16.mxu0 0
      %426 = vmatmul.mubr.bf16.gmra.mrb[0].mxu0 %v388
      %v427 = vpop.f32.mrb[0].mxu0
      %v428 = vadd.f32 0.0, %v427
      %v429 = vpop.f32.mrb[0].mxu0
      %v430 = vpop.f32.mrb[0].mxu0
      %v431 = vpop.f32.mrb[0].mxu0
      %432 = vdwg.mxu0
      %vm433 = vcmask 64512
      %v434 = vsel %vm433, %v382, -inf
      %435 = vmax.xlane.f32.xlu0 %v434
      %v436 = vpop.xlane.xlu0 %435
      %v437 = vsel %vm433, %v428, -inf
      %438 = vmax.xlane.f32.xlu0 %v437
      %v439 = vpop.xlane.xlu0 %438
      %v440 = vsub.f32 %v382, %v436
      %v441 = vsub.f32 %v428, %v439
      %v442 = vmul.f32 %v440, 1.442695
      %v443 = vpow.pop %v442
      %v444 = vmul.f32 %v441, 1.442695
      %v445 = vpow.pop %v444
      %v446 = vsel %vm433, %v443, 0.0
      %447 = vadd.xlane.f32.xlu0 %v446
      %v448 = vpop.xlane.xlu0 %447
      %v449 = vsel %vm433, %v445, 0.0
      %450 = vadd.xlane.f32.xlu0 %v449
      %v451 = vpop.xlane.xlu0 %450
      %v452 = vrcp.pop %v448
      %v453 = vrcp.pop %v451
      %v454 = vmul.f32 %v443, %v452
      %v455 = vmul.f32 %v445, %v453
      %v456 = vpack.c.bf16 %v454, %v454
      %v457 = vpack.c.bf16 %v455, %v455
      %v459 = vsel %vm433, %v456, 0
      %vm461 = vcmask 1043456
      %v463 = vsel %vm461, %v339, 0
      %465 = vmatprep.subr.bf16.mxu0 0
      %466 = vmatpush1.bf16.msra.mxu0 %v463
      %467 = vmatprep.subr.bf16.mxu0 0
      %468 = vmatpush1.bf16.msra.mxu0 0
      %469 = vmatprep.subr.bf16.mxu0 0
      %470 = vmatpush1.bf16.msra.mxu0 0
      %471 = vmatprep.subr.bf16.mxu0 0
      %472 = vmatpush1.bf16.msra.mxu0 0
      %473 = vmatprep.subr.bf16.mxu0 0
      %474 = vmatpush1.bf16.msra.mxu0 0
      %475 = vmatprep.subr.bf16.mxu0 0
      %476 = vmatpush1.bf16.msra.mxu0 0
      %477 = vmatprep.subr.bf16.mxu0 0
      %478 = vmatpush1.bf16.msra.mxu0 0
      %479 = vmatprep.subr.bf16.mxu0 0
      %480 = vmatpush1.bf16.msra.mxu0 0
      %481 = vmatprep.subr.bf16.mxu0 0
      %482 = vmatpush1.bf16.msra.mxu0 0
      %483 = vmatprep.subr.bf16.mxu0 0
      %484 = vmatpush1.bf16.msra.mxu0 0
      %485 = vmatprep.subr.bf16.mxu0 0
      %486 = vmatpush1.bf16.msra.mxu0 0
      %487 = vmatprep.subr.bf16.mxu0 0
      %488 = vmatpush1.bf16.msra.mxu0 0
      %489 = vmatprep.subr.bf16.mxu0 0
      %490 = vmatpush1.bf16.msra.mxu0 0
      %491 = vmatprep.subr.bf16.mxu0 0
      %492 = vmatpush1.bf16.msra.mxu0 0
      %493 = vmatprep.subr.bf16.mxu0 0
      %494 = vmatpush1.bf16.msra.mxu0 0
      %495 = vmatprep.subr.bf16.mxu0 0
      %496 = vmatpush1.bf16.msra.mxu0 0
      %497 = vmatprep.mubr.bf16.mxu0 0
      %498 = vmatmul.mubr.bf16.gmra.mrb[0].mxu0 %v459
      %v499 = vpop.f32.mrb[0].mxu0
      %v500 = vadd.f32 0.0, %v499
      %v501 = vpop.f32.mrb[0].mxu0
      %v502 = vpop.f32.mrb[0].mxu0
      %v503 = vpop.f32.mrb[0].mxu0
      %504 = vdwg.mxu0
      %v506 = vsel %vm433, %v457, 0
      %v509 = vsel %vm461, %v340, 0
      %511 = vmatprep.subr.bf16.mxu0 0
      %512 = vmatpush1.bf16.msra.mxu0 %v509
      %513 = vmatprep.subr.bf16.mxu0 0
      %514 = vmatpush1.bf16.msra.mxu0 0
      %515 = vmatprep.subr.bf16.mxu0 0
      %516 = vmatpush1.bf16.msra.mxu0 0
      %517 = vmatprep.subr.bf16.mxu0 0
      %518 = vmatpush1.bf16.msra.mxu0 0
      %519 = vmatprep.subr.bf16.mxu0 0
      %520 = vmatpush1.bf16.msra.mxu0 0
      %521 = vmatprep.subr.bf16.mxu0 0
      %522 = vmatpush1.bf16.msra.mxu0 0
      %523 = vmatprep.subr.bf16.mxu0 0
      %524 = vmatpush1.bf16.msra.mxu0 0
      %525 = vmatprep.subr.bf16.mxu0 0
      %526 = vmatpush1.bf16.msra.mxu0 0
      %527 = vmatprep.subr.bf16.mxu0 0
      %528 = vmatpush1.bf16.msra.mxu0 0
      %529 = vmatprep.subr.bf16.mxu0 0
      %530 = vmatpush1.bf16.msra.mxu0 0
      %531 = vmatprep.subr.bf16.mxu0 0
      %532 = vmatpush1.bf16.msra.mxu0 0
      %533 = vmatprep.subr.bf16.mxu0 0
      %534 = vmatpush1.bf16.msra.mxu0 0
      %535 = vmatprep.subr.bf16.mxu0 0
      %536 = vmatpush1.bf16.msra.mxu0 0
      %537 = vmatprep.subr.bf16.mxu0 0
      %538 = vmatpush1.bf16.msra.mxu0 0
      %539 = vmatprep.subr.bf16.mxu0 0
      %540 = vmatpush1.bf16.msra.mxu0 0
      %541 = vmatprep.subr.bf16.mxu0 0
      %542 = vmatpush1.bf16.msra.mxu0 0
      %543 = vmatprep.mubr.bf16.mxu0 0
      %544 = vmatmul.mubr.bf16.gmra.mrb[0].mxu0 %v506
      %v545 = vpop.f32.mrb[0].mxu0
      %v546 = vadd.f32 0.0, %v545
      %v547 = vpop.f32.mrb[0].mxu0
      %v548 = vpop.f32.mrb[0].mxu0
      %v549 = vpop.f32.mrb[0].mxu0
      %550 = vdwg.mxu0
      %v551 = vpack.c.bf16 %v546, %v500
      %v552 = vld [vmem:[#allocation11] sm:$0xf]
      %v553 = vld [vmem:[#allocation11 + $0x4] sm:$0xf]
      %v554 = vld [vmem:[#allocation11 + $0x8] sm:$0xf]
      %v555 = vld [vmem:[#allocation11 + $0xc] sm:$0xf]
      %v556 = vld [vmem:[%s8] sm:$0x1]
      %v558 = vlaneseq
      %v559 = vshrl.u32 %v558, 7
      %v560 = vsub.s32 0, %v559
      %v561 = vrot.slane %v556, %v560
      %v567 = vunpack.c.l.b16 %v552
      %v568 = vunpack.c.l.b16 %v553
      %v569 = vunpack.c.l.b16 %v554
      %v570 = vunpack.c.l.b16 %v555
      %v571 = vpack.c.b16 %v568, %v567
      %v572 = vpack.c.b16 %v570, %v569
      %v576 = vsel %vm160, %v551, 0
      %578 = vmatprep.subr.bf16.mxu0 0
      %579 = vmatpush1.bf16.msra.mxu0 %v571
      %580 = vmatprep.subr.bf16.mxu0 0
      %581 = vmatpush1.bf16.msra.mxu0 %v572
      %582 = vmatprep.subr.bf16.mxu0 0
      %583 = vmatpush1.bf16.msra.mxu0 0
      %584 = vmatprep.subr.bf16.mxu0 0
      %585 = vmatpush1.bf16.msra.mxu0 0
      %586 = vmatprep.subr.bf16.mxu0 0
      %587 = vmatpush1.bf16.msra.mxu0 0
      %588 = vmatprep.subr.bf16.mxu0 0
      %589 = vmatpush1.bf16.msra.mxu0 0
      %590 = vmatprep.subr.bf16.mxu0 0
      %591 = vmatpush1.bf16.msra.mxu0 0
      %592 = vmatprep.subr.bf16.mxu0 0
      %593 = vmatpush1.bf16.msra.mxu0 0
      %594 = vmatprep.subr.bf16.mxu0 0
      %595 = vmatpush1.bf16.msra.mxu0 0
      %596 = vmatprep.subr.bf16.mxu0 0
      %597 = vmatpush1.bf16.msra.mxu0 0
      %598 = vmatprep.subr.bf16.mxu0 0
      %599 = vmatpush1.bf16.msra.mxu0 0
      %600 = vmatprep.subr.bf16.mxu0 0
      %601 = vmatpush1.bf16.msra.mxu0 0
      %602 = vmatprep.subr.bf16.mxu0 0
      %603 = vmatpush1.bf16.msra.mxu0 0
      %604 = vmatprep.subr.bf16.mxu0 0
      %605 = vmatpush1.bf16.msra.mxu0 0
      %606 = vmatprep.subr.bf16.mxu0 0
      %607 = vmatpush1.bf16.msra.mxu0 0
      %608 = vmatprep.subr.bf16.mxu0 0
      %609 = vmatpush1.bf16.msra.mxu0 0
      %610 = vmatprep.mubr.bf16.mxu0 0
      %611 = vmatmul.mubr.bf16.gmra.mrb[0].mxu0 %v576
      %v612 = vpop.f32.mrb[0].mxu0
      %v613 = vadd.f32 %v561, %v612
      %v614 = vpop.f32.mrb[0].mxu0
      %v615 = vpop.f32.mrb[0].mxu0
      %v616 = vadd.f32 %v561, %v615
      %v617 = vpop.f32.mrb[0].mxu0
      %618 = vdwg.mxu0
      %v619 = vsel %vm160, %v613, 0.0
      %620 = vadd.xlane.f32.xlu0 %v619
      %v621 = vpop.xlane.xlu0 %620
      %v622 = vsel %vm160, %v616, 0.0
      %623 = vadd.xlane.f32.xlu0 %v622
      %v624 = vpop.xlane.xlu0 %623
      %v625 = vrcp.pop 32.0
      %v626 = vmul.f32 %v621, %v625
      %v627 = vmul.f32 %v624, %v625
      %v628 = vsub.f32 %v613, %v626
      %v629 = vsub.f32 %v616, %v627
      %v630 = vmul.f32 %v628, %v628
      %v631 = vmul.f32 %v629, %v629
      %v632 = vsel %vm160, %v630, 0.0
      %633 = vadd.xlane.f32.xlu0 %v632
      %v634 = vpop.xlane.xlu0 %633
      %v635 = vsel %vm160, %v631, 0.0
      %636 = vadd.xlane.f32.xlu0 %v635
      %v637 = vpop.xlane.xlu0 %636
      %v638 = vmul.f32 %v634, %v625
      %v639 = vmul.f32 %v637, %v625
      %v640 = vadd.f32 %v638, 1e-05
      %v641 = vadd.f32 %v639, 1e-05
      %v642 = vrsqrt.pop %v640
      %v643 = vrsqrt.pop %v641
      %v644 = vmul.f32 %v628, %v642
      %v645 = vmul.f32 %v629, %v643
      %v646 = vld [vmem:[%s9] sm:$0x1]
      %v648 = vlaneseq
      %v649 = vshrl.u32 %v648, 7
      %v650 = vsub.s32 0, %v649
      %v651 = vrot.slane %v646, %v650
      %v653 = vmul.f32 %v644, %v651
      %v654 = vmul.f32 %v645, %v651
      %v655 = vld [vmem:[%s10] sm:$0x1]
      %v657 = vlaneseq
      %v658 = vshrl.u32 %v657, 7
      %v659 = vsub.s32 0, %v658
      %v660 = vrot.slane %v655, %v659
      %v662 = vadd.f32 %v653, %v660
      %v663 = vadd.f32 %v654, %v660
      %v664 = vpack.c.bf16 %v663, %v662
      %665 = vst.msk [vmem:[#allocation2] sm:$0xff] %vm160, %v664
    $region81: #{tpu_custom_call.1} parent=1 // pred_fallthru
      _
    %v666 = vld [vmem:[#allocation2] sm:$0xff]
    %v667 = vld [vmem:[#allocation12] sm:$0xff]
    %v668 = vld [vmem:[#allocation12 + $0x8] sm:$0xff]
    %v669 = vld [vmem:[#allocation12 + $0x10] sm:$0xff]
    %v670 = vld [vmem:[#allocation12 + $0x18] sm:$0xff]
    %v671 = vld [vmem:[#allocation12 + $0x20] sm:$0xff]
    %v672 = vld [vmem:[#allocation12 + $0x28] sm:$0xff]
    %v673 = vld [vmem:[#allocation12 + $0x30] sm:$0xff]
    %v674 = vld [vmem:[#allocation12 + $0x38] sm:$0xff]
    %v675 = vld [vmem:[%s12] sm:$0xf]
    %v677 = vlaneseq
    %v678 = vshrl.u32 %v677, 7
    %v679 = vsub.s32 0, %v678
    %v680 = vrot.slane %v675, %v679
    %v681 = vlaneseq
    %v682 = vshrl.u32 %v681, 7
    %v683 = vsub.s32 1, %v682
    %v684 = vrot.slane %v675, %v683
    %v685 = vlaneseq
    %v686 = vshrl.u32 %v685, 7
    %v687 = vsub.s32 2, %v686
    %v688 = vrot.slane %v675, %v687
    %v689 = vlaneseq
    %v690 = vshrl.u32 %v689, 7
    %v691 = vsub.s32 3, %v690
    %v692 = vrot.slane %v675, %v691
    %v705 = vunpack.c.l.b16 %v667
    %v706 = vunpack.c.h.b16 %v667
    %v707 = vunpack.c.l.b16 %v668
    %v708 = vunpack.c.h.b16 %v668
    %v709 = vunpack.c.l.b16 %v669
    %v710 = vunpack.c.h.b16 %v669
    %v711 = vunpack.c.l.b16 %v670
    %v712 = vunpack.c.h.b16 %v670
    %v713 = vunpack.c.l.b16 %v671
    %v714 = vunpack.c.h.b16 %v671
    %v715 = vunpack.c.l.b16 %v672
    %v716 = vunpack.c.h.b16 %v672
    %v717 = vunpack.c.l.b16 %v673
    %v718 = vunpack.c.h.b16 %v673
    %v719 = vunpack.c.l.b16 %v674
    %v720 = vunpack.c.h.b16 %v674
    %v721 = vpack.c.b16 %v709, %v705
    %v722 = vpack.c.b16 %v710, %v706
    %v723 = vpack.c.b16 %v711, %v707
    %v724 = vpack.c.b16 %v712, %v708
    %v725 = vpack.c.b16 %v717, %v713
    %v726 = vpack.c.b16 %v718, %v714
    %v727 = vpack.c.b16 %v719, %v715
    %v728 = vpack.c.b16 %v720, %v716
    %vm737 = vcmask 261120
    %v739 = vsel %vm737, %v666, 0
    %741 = vmatprep.subr.bf16.mxu0 %v722
    %742 = vmatpush1.bf16.msra.mxu0 %v721
    %743 = vmatprep.subr.bf16.mxu0 %v726
    %744 = vmatpush1.bf16.msra.mxu0 %v725
    %745 = vmatprep.subr.bf16.mxu0 0
    %746 = vmatpush1.bf16.msra.mxu0 0
    %747 = vmatprep.subr.bf16.mxu0 0
    %748 = vmatpush1.bf16.msra.mxu0 0
    %749 = vmatprep.subr.bf16.mxu0 0
    %750 = vmatpush1.bf16.msra.mxu0 0
    %751 = vmatprep.subr.bf16.mxu0 0
    %752 = vmatpush1.bf16.msra.mxu0 0
    %753 = vmatprep.subr.bf16.mxu0 0
    %754 = vmatpush1.bf16.msra.mxu0 0
    %755 = vmatprep.subr.bf16.mxu0 0
    %756 = vmatpush1.bf16.msra.mxu0 0
    %757 = vmatprep.subr.bf16.mxu0 0
    %758 = vmatpush1.bf16.msra.mxu0 0
    %759 = vmatprep.subr.bf16.mxu0 0
    %760 = vmatpush1.bf16.msra.mxu0 0
    %761 = vmatprep.subr.bf16.mxu0 0
    %762 = vmatpush1.bf16.msra.mxu0 0
    %763 = vmatprep.subr.bf16.mxu0 0
    %764 = vmatpush1.bf16.msra.mxu0 0
    %765 = vmatprep.subr.bf16.mxu0 0
    %766 = vmatpush1.bf16.msra.mxu0 0
    %767 = vmatprep.subr.bf16.mxu0 0
    %768 = vmatpush1.bf16.msra.mxu0 0
    %769 = vmatprep.subr.bf16.mxu0 0
    %770 = vmatpush1.bf16.msra.mxu0 0
    %771 = vmatprep.subr.bf16.mxu0 0
    %772 = vmatpush1.bf16.msra.mxu0 0
    %773 = vmatprep.mubr.bf16.mxu0 0
    %774 = vmatmul.mubr.bf16.gmra.mrb[0].mxu0 %v739
    %v775 = vpop.f32.mrb[0].mxu0
    %v776 = vadd.f32 %v680, %v775
    %v777 = vpop.f32.mrb[0].mxu0
    %v778 = vadd.f32 %v684, %v777
    %v779 = vpop.f32.mrb[0].mxu0
    %v780 = vadd.f32 %v680, %v779
    %v781 = vpop.f32.mrb[0].mxu0
    %v782 = vadd.f32 %v684, %v781
    %783 = vdwg.mxu0
    %784 = vmatprep.subr.bf16.mxu0 %v724
    %785 = vmatpush1.bf16.msra.mxu0 %v723
    %786 = vmatprep.subr.bf16.mxu0 %v728
    %787 = vmatpush1.bf16.msra.mxu0 %v727
    %788 = vmatprep.subr.bf16.mxu0 0
    %789 = vmatpush1.bf16.msra.mxu0 0
    %790 = vmatprep.subr.bf16.mxu0 0
    %791 = vmatpush1.bf16.msra.mxu0 0
    %792 = vmatprep.subr.bf16.mxu0 0
    %793 = vmatpush1.bf16.msra.mxu0 0
    %794 = vmatprep.subr.bf16.mxu0 0
    %795 = vmatpush1.bf16.msra.mxu0 0
    %796 = vmatprep.subr.bf16.mxu0 0
    %797 = vmatpush1.bf16.msra.mxu0 0
    %798 = vmatprep.subr.bf16.mxu0 0
    %799 = vmatpush1.bf16.msra.mxu0 0
    %800 = vmatprep.subr.bf16.mxu0 0
    %801 = vmatpush1.bf16.msra.mxu0 0
    %802 = vmatprep.subr.bf16.mxu0 0
    %803 = vmatpush1.bf16.msra.mxu0 0
    %804 = vmatprep.subr.bf16.mxu0 0
    %805 = vmatpush1.bf16.msra.mxu0 0
    %806 = vmatprep.subr.bf16.mxu0 0
    %807 = vmatpush1.bf16.msra.mxu0 0
    %808 = vmatprep.subr.bf16.mxu0 0
    %809 = vmatpush1.bf16.msra.mxu0 0
    %810 = vmatprep.subr.bf16.mxu0 0
    %811 = vmatpush1.bf16.msra.mxu0 0
    %812 = vmatprep.subr.bf16.mxu0 0
    %813 = vmatpush1.bf16.msra.mxu0 0
    %814 = vmatprep.subr.bf16.mxu0 0
    %815 = vmatpush1.bf16.msra.mxu0 0
    %816 = vmatprep.mubr.bf16.mxu0 0
    %817 = vmatmul.mubr.bf16.gmra.mrb[0].mxu0 %v739
    %v818 = vpop.f32.mrb[0].mxu0
    %v819 = vadd.f32 %v688, %v818
    %v820 = vpop.f32.mrb[0].mxu0
    %v821 = vadd.f32 %v692, %v820
    %v822 = vpop.f32.mrb[0].mxu0
    %v823 = vadd.f32 %v688, %v822
    %v824 = vpop.f32.mrb[0].mxu0
    %v825 = vadd.f32 %v692, %v824
    %826 = vdwg.mxu0
    %827 = vst [vmem:[#allocation14] sm:$0xff] %v776
    %828 = vst [vmem:[#allocation14 + $0x8] sm:$0xff] %v778
    %829 = vst [vmem:[#allocation14 + $0x10] sm:$0xff] %v819
    %830 = vst [vmem:[#allocation14 + $0x18] sm:$0xff] %v821
    %831 = vst [vmem:[#allocation14 + $0x20] sm:$0xff] %v780
    %832 = vst [vmem:[#allocation14 + $0x28] sm:$0xff] %v782
    %833 = vst [vmem:[#allocation14 + $0x30] sm:$0xff] %v823
    %834 = vst [vmem:[#allocation14 + $0x38] sm:$0xff] %v825
    // Predicated region
    $region82: #{tpu_custom_call.1} parent=1 // pred_check
      _
    $region83: #{tpu_custom_call.1} parent=1 // pred_check_branch
      %836 = sbr.rel (0) target = $region85
    $region84: #{tpu_custom_call.1} parent=1 // pred_region
      %s838 = ssub.s32 1024, 1024
      %839 = vsyncadd [#allocation5], %s838
      %s840 = sshll.u32 [#allocation14], 4
      %s841 = int_to_ptr.vmem [resolvable:$true] %s840
      %846 = dma.vmem_to_hbm [thread:$0]  %s841, 1024, %s13, [#allocation5], 512, 512, 32
    $region85: #{tpu_custom_call.1} parent=1 // pred_fallthru
      _
    // Predicated region
    $region86: #{tpu_custom_call.1} parent=1 // pred_check
      _
    $region87: #{tpu_custom_call.1} parent=1 // pred_check_branch
      %848 = sbr.rel (0) target = $region89
    $region88: #{tpu_custom_call.1} parent=1 // pred_region
      %849 = dma.done [#allocation5], 1024
    $region89: #{tpu_custom_call.1} parent=1 // pred_fallthru
      _
    %850 = vsyncpa [#allocation4], 1
    %851 = vsyncpa [#allocation7], 1
    %852 = vsyncpa [#allocation10], 1
    %853 = vsyncpa [#allocation13], 1
    %854 = vsyncpa [#allocation5], 1

</llo_original>
